<compile_context>
chip_gen: v7x
topology: tpu7x:2x2x1
jax: 0.10.0
libtpu: 0.0.40
codegen_flags: <defaults>
</compile_context>

<pallas_src>
import functools

import jax
import jax.numpy as jnp
from jax import lax
from jax.experimental import pallas as pl
from jax.experimental.pallas import tpu as pltpu

_INV_SQRT2 = 0.7071067811865476


def _round_up(x, m):
    return (x + m - 1) // m * m


def _embed_fc_kernel(x_ref, w1_ref, b1_ref, w2_ref, b2_ref, o_ref):
    # Linear1 -> exact GELU -> Linear2, fully fused on one row tile.
    h = jnp.dot(x_ref[...], w1_ref[...], preferred_element_type=jnp.float32)
    h = h + b1_ref[...]                                    # f32 bias add
    h = 0.5 * h * (1.0 + lax.erf(h * _INV_SQRT2))          # exact GELU, f32
    y = jnp.dot(h.astype(w2_ref.dtype), w2_ref[...],
                preferred_element_type=jnp.float32)
    o_ref[...] = (y + b2_ref[...]).astype(o_ref.dtype)


def prepare_embed_fc_params(params, mxu_dtype=jnp.bfloat16):
    """One-time prep: transpose + zero-pad weights/biases to lane-dense shapes.

    Zero padding keeps the math exact: padded x columns hit zero weight rows,
    GELU(0) == 0, padded output columns get bias 0 and are sliced off later.
    """
    emb_dim, input_dim = params["w1"].shape                # torch Linear (out, in)
    din_p = _round_up(input_dim, 128)                      # lane-dense K dim
    demb_p = _round_up(emb_dim, 128)                       # lane-dense N dim

    w1 = jnp.zeros((din_p, demb_p), mxu_dtype).at[:input_dim, :emb_dim].set(
        params["w1"].T.astype(mxu_dtype))
    w2 = jnp.zeros((demb_p, demb_p), mxu_dtype).at[:emb_dim, :emb_dim].set(
        params["w2"].T.astype(mxu_dtype))
    b1 = jnp.zeros((1, demb_p), jnp.float32).at[:, :emb_dim].set(
        params["b1"].astype(jnp.float32)[None, :])
    b2 = jnp.zeros((1, demb_p), jnp.float32).at[:, :emb_dim].set(
        params["b2"].astype(jnp.float32)[None, :])
    return {
        "w1": w1, "b1": b1, "w2": w2, "b2": b2,
        "input_dim": int(input_dim), "emb_dim": int(emb_dim),
    }


def embed_fc_forward(prepped, x, *, tile_m=512, out_dtype=jnp.float32,
                     trim_output=True):
    """EmbedFC.forward: x.view(-1, input_dim) -> Linear -> GELU -> Linear.

    `prepped` comes from prepare_embed_fc_params (pre-padded weights/biases).
    tile_m: raise toward 1024-2048 on v5e/v6e for very large M; keep <=512-1024
    on v7x (64 MiB physical VMEM).  out_dtype=jnp.bfloat16 halves output HBM
    writeback if the consumer accepts it.
    """
    input_dim, emb_dim = prepped["input_dim"], prepped["emb_dim"]
    din_p, demb_p = prepped["w1"].shape
    cdt = prepped["w1"].dtype

    x2 = x.reshape(-1, input_dim)                          # x.view(-1, input_dim)
    m = x2.shape[0]

    # Pad only the lane/K dimension (zero fill -> exactness); the M dimension
    # uses a cdiv grid with a partial last tile instead of a padded copy.
    xk = x2.astype(cdt)
    if din_p != input_dim:
        xk = jnp.pad(xk, ((0, 0), (0, din_p - input_dim)))

    # Pick tile_m so the grid has >=2 steps when possible (v7x megacore),
    # multiple of 8 for sublane alignment.
    half = -(-m // 2)
    tile_m = max(8, min(tile_m, _round_up(half, 8)))
    grid_m = -(-m // tile_m)

    # Explicit scoped-VMEM budget (v5e default 16 MiB, v6e/v7x 32 MiB).
    itm = jnp.dtype(cdt).itemsize
    est = (2 * tile_m * din_p * itm                        # x (double-buffered)
           + (din_p * demb_p + demb_p * demb_p) * itm      # W1+W2 (single-buffered)
           + 2 * demb_p * 4                                # biases
           + 2 * tile_m * demb_p * jnp.dtype(out_dtype).itemsize   # out
           + 2 * tile_m * demb_p * 4)                      # f32 intermediates
    vmem_limit = int(min(64 * 1024 * 1024, max(32 * 1024 * 1024, 2 * est)))

    wspec = functools.partial(pl.BlockSpec, pipeline_mode=pl.Buffered(1))

    out = pl.pallas_call(
        _embed_fc_kernel,
        out_shape=jax.ShapeDtypeStruct((m, demb_p), out_dtype),
        grid_spec=pltpu.PrefetchScalarGridSpec(
            num_scalar_prefetch=0,
            grid=(grid_m,),
            in_specs=[
                pl.BlockSpec((tile_m, din_p), lambda i: (i, 0)),     # x row tile
                wspec((din_p, demb_p), lambda i: (0, 0)),            # W1 (resident)
                wspec((1, demb_p), lambda i: (0, 0)),                # b1
                wspec((demb_p, demb_p), lambda i: (0, 0)),           # W2 (resident)
                wspec((1, demb_p), lambda i: (0, 0)),                # b2
            ],
            out_specs=pl.BlockSpec((tile_m, demb_p), lambda i: (i, 0)),
        ),
        compiler_params=pltpu.CompilerParams(
            dimension_semantics=("parallel",),             # megacore on v7x
            vmem_limit_bytes=vmem_limit,
        ),
    )(xk, prepped["w1"], prepped["b1"], prepped["w2"], prepped["b2"])

    if trim_output and demb_p != emb_dim:
        out = out[:, :emb_dim]                             # drop lane padding
    return out


def embed_fc_reference(params, x):
    """Plain-JAX reference matching PyTorch EmbedFC (exact erf GELU)."""
    emb_dim, input_dim = params["w1"].shape
    x2 = x.reshape(-1, input_dim).astype(jnp.float32)
    h = x2 @ params["w1"].T + params["b1"]
    h = 0.5 * h * (1.0 + lax.erf(h * _INV_SQRT2))
    return h @ params["w2"].T + params["b2"]


def init_embed_fc_params(key, input_dim, emb_dim):
    """Deterministic synthetic params matching nn.Linear shapes/init scale."""
    k1, k2, k3, k4 = jax.random.split(key, 4)
    s1 = 1.0 / float(input_dim) ** 0.5
    s2 = 1.0 / float(emb_dim) ** 0.5
    return {
        "w1": jax.random.uniform(k1, (emb_dim, input_dim), jnp.float32, -s1, s1),
        "b1": jax.random.uniform(k2, (emb_dim,), jnp.float32, -s1, s1),
        "w2": jax.random.uniform(k3, (emb_dim, emb_dim), jnp.float32, -s2, s2),
        "b2": jax.random.uniform(k4, (emb_dim,), jnp.float32, -s2, s2),
    }


if __name__ == "__main__":
    key = jax.random.PRNGKey(0)
    kx, kp = jax.random.split(key)

    # Matches EmbedFC usage in 17Diffusion.py: e.g. one-hot context (n_classes=10)
    # embedded to 2*n_feat; x.view(-1, input_dim) flattens to (batch, input_dim).
    batch, input_dim, emb_dim = 8, 10, 64
    x = jax.random.normal(kx, (batch, input_dim), jnp.float32)
    params = init_embed_fc_params(kp, input_dim, emb_dim)
    ref = embed_fc_reference(params, x)

    # Default fast path: bf16 MXU operands, f32 accumulation.
    prepped_bf16 = jax.block_until_ready(
        prepare_embed_fc_params(params, mxu_dtype=jnp.bfloat16))
    fwd_bf16 = jax.jit(functools.partial(embed_fc_forward, prepped_bf16))
    out = jax.block_until_ready(fwd_bf16(x))
    assert out.shape == (batch, emb_dim), out.shape
    assert bool(jnp.all(jnp.isfinite(out)))
    assert bool(jnp.allclose(out, ref, atol=2e-2, rtol=2e-2)), float(
        jnp.max(jnp.abs(out - ref)))

    # f32 operand path: exact match against the reference.
    prepped_f32 = jax.block_until_ready(
        prepare_embed_fc_params(params, mxu_dtype=jnp.float32))
    fwd_f32 = jax.jit(functools.partial(embed_fc_forward, prepped_f32))
    out32 = jax.block_until_ready(fwd_f32(x))
    assert bool(jnp.allclose(out32, ref, atol=1e-5, rtol=1e-5)), float(
        jnp.max(jnp.abs(out32 - ref)))

    # Exercise the partial-last-tile (M not multiple of tile) path.
    x_odd = jax.random.normal(kx, (13, input_dim), jnp.float32)
    out_odd = jax.block_until_ready(fwd_f32(x_odd))
    ref_odd = embed_fc_reference(params, x_odd)
    assert out_odd.shape == (13, emb_dim)
    assert bool(jnp.allclose(out_odd, ref_odd, atol=1e-5, rtol=1e-5))

    print("KERNEL_OK")
</pallas_src>

<mosaic_0001>
module attributes {stable_mosaic.version = 11 : i64} {
  func.func @_embed_fc_kernel(%arg0: i32, %arg1: memref<8x128xbf16, #tpu.memory_space<vmem>>, %arg2: memref<128x128xbf16, #tpu.memory_space<vmem>>, %arg3: memref<1x128xf32, #tpu.memory_space<vmem>>, %arg4: memref<128x128xbf16, #tpu.memory_space<vmem>>, %arg5: memref<1x128xf32, #tpu.memory_space<vmem>>, %arg6: memref<8x128xf32, #tpu.memory_space<vmem>>) attributes {dimension_semantics = [#tpu.dimension_semantics<parallel>], iteration_bounds = array<i64: 1>, scalar_prefetch = 0 : i64, scratch_operands = 0 : i64, tpu.core_type = #tpu.core_type<tc>, window_params = [{transform_indices = @transform_0, window_bounds = array<i64: 8, 128>}, {pipeline_mode = #tpu.pipeline_mode<synchronous>, transform_indices = @transform_1, window_bounds = array<i64: 128, 128>}, {pipeline_mode = #tpu.pipeline_mode<synchronous>, transform_indices = @transform_2, window_bounds = array<i64: 1, 128>}, {pipeline_mode = #tpu.pipeline_mode<synchronous>, transform_indices = @transform_3, window_bounds = array<i64: 128, 128>}, {pipeline_mode = #tpu.pipeline_mode<synchronous>, transform_indices = @transform_4, window_bounds = array<i64: 1, 128>}, {transform_indices = @transform_5, window_bounds = array<i64: 8, 128>}]} {
    %c0 = arith.constant 0 : index
    %c0_0 = arith.constant 0 : index
    %0 = vector.load %arg1[%c0, %c0_0] : memref<8x128xbf16, #tpu.memory_space<vmem>>, vector<8x128xbf16>
    %c0_1 = arith.constant 0 : index
    %c0_2 = arith.constant 0 : index
    %1 = vector.load %arg2[%c0_1, %c0_2] : memref<128x128xbf16, #tpu.memory_space<vmem>>, vector<128x128xbf16>
    %cst = arith.constant dense<0.000000e+00> : vector<8x128xf32>
    %2 = tpu.matmul %0, %1, %cst {dimension_numbers = #tpu.dot_dimension_numbers<[1], [0], [0], [1], [0, 0, 1, 1], [], []>} : vector<8x128xbf16>, vector<128x128xbf16>, vector<8x128xf32> -> vector<8x128xf32>
    %c0_3 = arith.constant 0 : index
    %c0_4 = arith.constant 0 : index
    %3 = vector.load %arg3[%c0_3, %c0_4] : memref<1x128xf32, #tpu.memory_space<vmem>>, vector<1x128xf32>
    %4 = vector.broadcast %3 : vector<1x128xf32> to vector<8x128xf32>
    %5 = arith.addf %2, %4 : vector<8x128xf32>
    %cst_5 = arith.constant 5.000000e-01 : f32
    %6 = vector.broadcast %cst_5 : f32 to vector<8x128xf32>
    %7 = arith.mulf %6, %5 : vector<8x128xf32>
    %cst_6 = arith.constant 0.707106769 : f32
    %8 = vector.broadcast %cst_6 : f32 to vector<8x128xf32>
    %9 = arith.mulf %5, %8 : vector<8x128xf32>
    %10 = math.erf %9 : vector<8x128xf32>
    %cst_7 = arith.constant 1.000000e+00 : f32
    %11 = vector.broadcast %cst_7 : f32 to vector<8x128xf32>
    %12 = arith.addf %11, %10 : vector<8x128xf32>
    %13 = arith.mulf %7, %12 : vector<8x128xf32>
    %14 = arith.truncf %13 : vector<8x128xf32> to vector<8x128xbf16>
    %c0_8 = arith.constant 0 : index
    %c0_9 = arith.constant 0 : index
    %15 = vector.load %arg4[%c0_8, %c0_9] : memref<128x128xbf16, #tpu.memory_space<vmem>>, vector<128x128xbf16>
    %cst_10 = arith.constant dense<0.000000e+00> : vector<8x128xf32>
    %16 = tpu.matmul %14, %15, %cst_10 {dimension_numbers = #tpu.dot_dimension_numbers<[1], [0], [0], [1], [0, 0, 1, 1], [], []>} : vector<8x128xbf16>, vector<128x128xbf16>, vector<8x128xf32> -> vector<8x128xf32>
    %c0_11 = arith.constant 0 : index
    %c0_12 = arith.constant 0 : index
    %17 = vector.load %arg5[%c0_11, %c0_12] : memref<1x128xf32, #tpu.memory_space<vmem>>, vector<1x128xf32>
    %18 = vector.broadcast %17 : vector<1x128xf32> to vector<8x128xf32>
    %19 = arith.addf %16, %18 : vector<8x128xf32>
    %c0_13 = arith.constant 0 : index
    %c0_14 = arith.constant 0 : index
    %20 = vector.load %arg6[%c0_13, %c0_14] : memref<8x128xf32, #tpu.memory_space<vmem>>, vector<8x128xf32>
    tpu.vector_store %arg6[%c0_13, %c0_14], %19 {strides = array<i32>} : memref<8x128xf32, #tpu.memory_space<vmem>>, vector<8x128xf32>,
    return
  }
  func.func @transform_0(%arg0: i32) -> (i32, i32) {
    %c0_i32 = arith.constant 0 : i32
    %c0_i32_0 = arith.constant 0 : i32
    return %arg0, %c0_i32 : i32, i32
  }
  func.func @transform_1(%arg0: i32) -> (i32, i32) {
    %c0_i32 = arith.constant 0 : i32
    %c0_i32_0 = arith.constant 0 : i32
    %c0_i32_1 = arith.constant 0 : i32
    return %c0_i32, %c0_i32_0 : i32, i32
  }
  func.func @transform_2(%arg0: i32) -> (i32, i32) {
    %c0_i32 = arith.constant 0 : i32
    %c0_i32_0 = arith.constant 0 : i32
    %c0_i32_1 = arith.constant 0 : i32
    return %c0_i32, %c0_i32_0 : i32, i32
  }
  func.func @transform_3(%arg0: i32) -> (i32, i32) {
    %c0_i32 = arith.constant 0 : i32
    %c0_i32_0 = arith.constant 0 : i32
    %c0_i32_1 = arith.constant 0 : i32
    return %c0_i32, %c0_i32_0 : i32, i32
  }
  func.func @transform_4(%arg0: i32) -> (i32, i32) {
    %c0_i32 = arith.constant 0 : i32
    %c0_i32_0 = arith.constant 0 : i32
    %c0_i32_1 = arith.constant 0 : i32
    return %c0_i32, %c0_i32_0 : i32, i32
  }
  func.func @transform_5(%arg0: i32) -> (i32, i32) {
    %c0_i32 = arith.constant 0 : i32
    %c0_i32_0 = arith.constant 0 : i32
    return %arg0, %c0_i32 : i32, i32
  }
}

</mosaic_0001>

<llo_original>
// kernel: embed_fc_forward.1
$region0: #{embed_fc_forward.1}
  #allocation0 [shape = 'u32[]', space=smem, size = 0x4, offset = 0x4, fixed_abs, tag = 'smem constant byte address 0x4 - core index']
  #allocation1 [shape = 'u32[144,128]{1,0:T(1,128)}', space=vmem, size = 0x12000, scoped, tag = 'internal scratch']
  %s0 = inlined_call_operand.vmem [shape: bf16[8,128], index: 0, kind: input, shape index: {}]
  %s1 = inlined_call_operand.hbm [shape: bf16[128,128], index: 1, kind: input, shape index: {}]
  %s2 = inlined_call_operand.vmem [shape: f32[1,128], index: 2, kind: input, shape index: {}]
  %s3 = inlined_call_operand.hbm [shape: bf16[128,128], index: 3, kind: input, shape index: {}]
  %s4 = inlined_call_operand.vmem [shape: f32[1,128], index: 4, kind: input, shape index: {}]
  %s5 = inlined_call_operand.hbm [shape: f32[8,128], index: 5, kind: output, shape index: {}]
  %s6 = sld [smem:[#allocation0]]
  $region38: #{embed_fc_forward.1} parent=0
    _
  %s8 = ssub.s32 1, %s6
  %s9 = scalar_select 0, %s8, %s6
  $region1: #{embed_fc_forward.1} parent=0
    #allocation2 [shape = 'u8[32768]{0}', space=vmem, size = 0x8000, scoped, tag = 'input window, operand 1, single buffered']
    #allocation3 [shape = 's32[1]{0}', space=sflag, size = 0x4, scoped, tag = 'scoped memory for embed_fc_forward.1']
    #allocation4 [shape = 's32[1]{0}', space=sflag, size = 0x4, scoped, tag = 'scoped memory for embed_fc_forward.1']
    #allocation5 [shape = 'u8[32768]{0}', space=vmem, size = 0x8000, scoped, tag = 'input window, operand 3, single buffered']
    #allocation6 [shape = 's32[1]{0}', space=sflag, size = 0x4, scoped, tag = 'scoped memory for embed_fc_forward.1']
    #allocation7 [shape = 'u8[4096]{0}', space=vmem, size = 0x1000, scoped, tag = 'output window, operand 0, single buffered']
    %10 = vsyncpa [#allocation3], 0
    %11 = vsyncpa [#allocation6], 0
    %12 = vsyncpa [#allocation4], 0
    // Predicated region
    $region2: #{embed_fc_forward.1} parent=1 // pred_check
      _
    $region3: #{embed_fc_forward.1} parent=1 // pred_check_branch
      %14 = sbr.rel (0) target = $region5
    $region4: #{embed_fc_forward.1} parent=1 // pred_region
      _
    $region5: #{embed_fc_forward.1} parent=1 // pred_fallthru
      _
    // Predicated region
    $region6: #{embed_fc_forward.1} parent=1 // pred_check
      _
    $region7: #{embed_fc_forward.1} parent=1 // pred_check_branch
      %16 = sbr.rel (0) target = $region9
    $region8: #{embed_fc_forward.1} parent=1 // pred_region
      %s18 = ssub.s32 1024, 1024
      %19 = vsyncadd [#allocation3], %s18
      %s20 = sshll.u32 [#allocation2], 4
      %s21 = int_to_ptr.vmem [resolvable:$true] %s20
      %26 = dma.hbm_to_vmem [thread:$0]  %s1, 1024, %s21, [#allocation3], 64, 64, 4
    $region9: #{embed_fc_forward.1} parent=1 // pred_fallthru
      _
    // Predicated region
    $region10: #{embed_fc_forward.1} parent=1 // pred_check
      _
    $region11: #{embed_fc_forward.1} parent=1 // pred_check_branch
      %28 = sbr.rel (0) target = $region13
    $region12: #{embed_fc_forward.1} parent=1 // pred_region
      _
    $region13: #{embed_fc_forward.1} parent=1 // pred_fallthru
      _
    // Predicated region
    $region14: #{embed_fc_forward.1} parent=1 // pred_check
      _
    $region15: #{embed_fc_forward.1} parent=1 // pred_check_branch
      %30 = sbr.rel (0) target = $region17
    $region16: #{embed_fc_forward.1} parent=1 // pred_region
      %s32 = ssub.s32 1024, 1024
      %33 = vsyncadd [#allocation6], %s32
      %s34 = sshll.u32 [#allocation5], 4
      %s35 = int_to_ptr.vmem [resolvable:$true] %s34
      %40 = dma.hbm_to_vmem [thread:$0]  %s3, 1024, %s35, [#allocation6], 64, 64, 4
    $region17: #{embed_fc_forward.1} parent=1 // pred_fallthru
      _
    // Predicated region
    $region18: #{embed_fc_forward.1} parent=1 // pred_check
      _
    $region19: #{embed_fc_forward.1} parent=1 // pred_check_branch
      %42 = sbr.rel (0) target = $region21
    $region20: #{embed_fc_forward.1} parent=1 // pred_region
      _
    $region21: #{embed_fc_forward.1} parent=1 // pred_fallthru
      _
    // Predicated region
    $region22: #{embed_fc_forward.1} parent=1 // pred_check
      _
    $region23: #{embed_fc_forward.1} parent=1 // pred_check_branch
      %44 = sbr.rel (0) target = $region25
    $region24: #{embed_fc_forward.1} parent=1 // pred_region
      %45 = dma.done [#allocation3], 1024
    $region25: #{embed_fc_forward.1} parent=1 // pred_fallthru
      _
    // Predicated region
    $region26: #{embed_fc_forward.1} parent=1 // pred_check
      _
    $region27: #{embed_fc_forward.1} parent=1 // pred_check_branch
      %47 = sbr.rel (0) target = $region29
    $region28: #{embed_fc_forward.1} parent=1 // pred_region
      %48 = dma.done [#allocation6], 1024
    $region29: #{embed_fc_forward.1} parent=1 // pred_fallthru
      _
    %v50 = vld [vmem:[%s0] sm:$0xf]
    %v51 = vld [vmem:[#allocation2] sm:$0xf]
    %v52 = vld [vmem:[#allocation2 + $0x4] sm:$0xf]
    %v53 = vld [vmem:[#allocation2 + $0x8] sm:$0xf]
    %v54 = vld [vmem:[#allocation2 + $0xc] sm:$0xf]
    %v55 = vld [vmem:[#allocation2 + $0x10] sm:$0xf]
    %v56 = vld [vmem:[#allocation2 + $0x14] sm:$0xf]
    %v57 = vld [vmem:[#allocation2 + $0x18] sm:$0xf]
    %v58 = vld [vmem:[#allocation2 + $0x1c] sm:$0xf]
    %v59 = vld [vmem:[#allocation2 + $0x20] sm:$0xf]
    %v60 = vld [vmem:[#allocation2 + $0x24] sm:$0xf]
    %v61 = vld [vmem:[#allocation2 + $0x28] sm:$0xf]
    %v62 = vld [vmem:[#allocation2 + $0x2c] sm:$0xf]
    %v63 = vld [vmem:[#allocation2 + $0x30] sm:$0xf]
    %v64 = vld [vmem:[#allocation2 + $0x34] sm:$0xf]
    %v65 = vld [vmem:[#allocation2 + $0x38] sm:$0xf]
    %v66 = vld [vmem:[#allocation2 + $0x3c] sm:$0xf]
    %v67 = vld [vmem:[%s2] sm:$0x1]
    %v69 = vlaneseq
    %v70 = vshrl.u32 %v69, 7
    %v71 = vsub.s32 0, %v70
    %v72 = vrot.slane %v67, %v71
    %v90 = vunpack.c.l.b16 %v51
    %v91 = vunpack.c.l.b16 %v52
    %v92 = vunpack.c.l.b16 %v53
    %v93 = vunpack.c.l.b16 %v54
    %v94 = vunpack.c.l.b16 %v55
    %v95 = vunpack.c.l.b16 %v56
    %v96 = vunpack.c.l.b16 %v57
    %v97 = vunpack.c.l.b16 %v58
    %v98 = vunpack.c.l.b16 %v59
    %v99 = vunpack.c.l.b16 %v60
    %v100 = vunpack.c.l.b16 %v61
    %v101 = vunpack.c.l.b16 %v62
    %v102 = vunpack.c.l.b16 %v63
    %v103 = vunpack.c.l.b16 %v64
    %v104 = vunpack.c.l.b16 %v65
    %v105 = vunpack.c.l.b16 %v66
    %v106 = vpack.c.b16 %v91, %v90
    %v107 = vpack.c.b16 %v93, %v92
    %v108 = vpack.c.b16 %v95, %v94
    %v109 = vpack.c.b16 %v97, %v96
    %v110 = vpack.c.b16 %v99, %v98
    %v111 = vpack.c.b16 %v101, %v100
    %v112 = vpack.c.b16 %v103, %v102
    %v113 = vpack.c.b16 %v105, %v104
    %122 = vmatprep.subr.bf16.mxu0 0
    %123 = vmatpush1.bf16.msra.mxu0 %v106
    %124 = vmatprep.subr.bf16.mxu0 0
    %125 = vmatpush1.bf16.msra.mxu0 %v107
    %126 = vmatprep.subr.bf16.mxu0 0
    %127 = vmatpush1.bf16.msra.mxu0 %v108
    %128 = vmatprep.subr.bf16.mxu0 0
    %129 = vmatpush1.bf16.msra.mxu0 %v109
    %130 = vmatprep.subr.bf16.mxu0 0
    %131 = vmatpush1.bf16.msra.mxu0 %v110
    %132 = vmatprep.subr.bf16.mxu0 0
    %133 = vmatpush1.bf16.msra.mxu0 %v111
    %134 = vmatprep.subr.bf16.mxu0 0
    %135 = vmatpush1.bf16.msra.mxu0 %v112
    %136 = vmatprep.subr.bf16.mxu0 0
    %137 = vmatpush1.bf16.msra.mxu0 %v113
    %138 = vmatprep.subr.bf16.mxu0 0
    %139 = vmatpush1.bf16.msra.mxu0 0
    %140 = vmatprep.subr.bf16.mxu0 0
    %141 = vmatpush1.bf16.msra.mxu0 0
    %142 = vmatprep.subr.bf16.mxu0 0
    %143 = vmatpush1.bf16.msra.mxu0 0
    %144 = vmatprep.subr.bf16.mxu0 0
    %145 = vmatpush1.bf16.msra.mxu0 0
    %146 = vmatprep.subr.bf16.mxu0 0
    %147 = vmatpush1.bf16.msra.mxu0 0
    %148 = vmatprep.subr.bf16.mxu0 0
    %149 = vmatpush1.bf16.msra.mxu0 0
    %150 = vmatprep.subr.bf16.mxu0 0
    %151 = vmatpush1.bf16.msra.mxu0 0
    %152 = vmatprep.subr.bf16.mxu0 0
    %153 = vmatpush1.bf16.msra.mxu0 0
    %154 = vmatprep.mubr.bf16.mxu0 0
    %155 = vmatmul.mubr.bf16.gmra.mrb[0].mxu0 %v50
    %v156 = vpop.f32.mrb[0].mxu0
    %v157 = vadd.f32 %v72, %v156
    %v158 = vpop.f32.mrb[0].mxu0
    %v159 = vpop.f32.mrb[0].mxu0
    %v160 = vpop.f32.mrb[0].mxu0
    %161 = vdwg.mxu0
    %v162 = vmul.f32 %v157, 0.5
    %v163 = vmul.f32 %v157, 0.70710677
    %v164 = verf.f32.pop %v163
    %v165 = vadd.f32 %v164, 1.0
    %v166 = vmul.f32 %v162, %v165
    %v167 = vpack.c.bf16 %v166, %v166
    %v168 = vld [vmem:[#allocation5] sm:$0xf]
    %v169 = vld [vmem:[#allocation5 + $0x4] sm:$0xf]
    %v170 = vld [vmem:[#allocation5 + $0x8] sm:$0xf]
    %v171 = vld [vmem:[#allocation5 + $0xc] sm:$0xf]
    %v172 = vld [vmem:[#allocation5 + $0x10] sm:$0xf]
    %v173 = vld [vmem:[#allocation5 + $0x14] sm:$0xf]
    %v174 = vld [vmem:[#allocation5 + $0x18] sm:$0xf]
    %v175 = vld [vmem:[#allocation5 + $0x1c] sm:$0xf]
    %v176 = vld [vmem:[#allocation5 + $0x20] sm:$0xf]
    %v177 = vld [vmem:[#allocation5 + $0x24] sm:$0xf]
    %v178 = vld [vmem:[#allocation5 + $0x28] sm:$0xf]
    %v179 = vld [vmem:[#allocation5 + $0x2c] sm:$0xf]
    %v180 = vld [vmem:[#allocation5 + $0x30] sm:$0xf]
    %v181 = vld [vmem:[#allocation5 + $0x34] sm:$0xf]
    %v182 = vld [vmem:[#allocation5 + $0x38] sm:$0xf]
    %v183 = vld [vmem:[#allocation5 + $0x3c] sm:$0xf]
    %v184 = vld [vmem:[%s4] sm:$0x1]
    %v186 = vlaneseq
    %v187 = vshrl.u32 %v186, 7
    %v188 = vsub.s32 0, %v187
    %v189 = vrot.slane %v184, %v188
    %v207 = vunpack.c.l.b16 %v168
    %v208 = vunpack.c.l.b16 %v169
    %v209 = vunpack.c.l.b16 %v170
    %v210 = vunpack.c.l.b16 %v171
    %v211 = vunpack.c.l.b16 %v172
    %v212 = vunpack.c.l.b16 %v173
    %v213 = vunpack.c.l.b16 %v174
    %v214 = vunpack.c.l.b16 %v175
    %v215 = vunpack.c.l.b16 %v176
    %v216 = vunpack.c.l.b16 %v177
    %v217 = vunpack.c.l.b16 %v178
    %v218 = vunpack.c.l.b16 %v179
    %v219 = vunpack.c.l.b16 %v180
    %v220 = vunpack.c.l.b16 %v181
    %v221 = vunpack.c.l.b16 %v182
    %v222 = vunpack.c.l.b16 %v183
    %v223 = vpack.c.b16 %v208, %v207
    %v224 = vpack.c.b16 %v210, %v209
    %v225 = vpack.c.b16 %v212, %v211
    %v226 = vpack.c.b16 %v214, %v213
    %v227 = vpack.c.b16 %v216, %v215
    %v228 = vpack.c.b16 %v218, %v217
    %v229 = vpack.c.b16 %v220, %v219
    %v230 = vpack.c.b16 %v222, %v221
    %239 = vmatprep.subr.bf16.mxu0 0
    %240 = vmatpush1.bf16.msra.mxu0 %v223
    %241 = vmatprep.subr.bf16.mxu0 0
    %242 = vmatpush1.bf16.msra.mxu0 %v224
    %243 = vmatprep.subr.bf16.mxu0 0
    %244 = vmatpush1.bf16.msra.mxu0 %v225
    %245 = vmatprep.subr.bf16.mxu0 0
    %246 = vmatpush1.bf16.msra.mxu0 %v226
    %247 = vmatprep.subr.bf16.mxu0 0
    %248 = vmatpush1.bf16.msra.mxu0 %v227
    %249 = vmatprep.subr.bf16.mxu0 0
    %250 = vmatpush1.bf16.msra.mxu0 %v228
    %251 = vmatprep.subr.bf16.mxu0 0
    %252 = vmatpush1.bf16.msra.mxu0 %v229
    %253 = vmatprep.subr.bf16.mxu0 0
    %254 = vmatpush1.bf16.msra.mxu0 %v230
    %255 = vmatprep.subr.bf16.mxu0 0
    %256 = vmatpush1.bf16.msra.mxu0 0
    %257 = vmatprep.subr.bf16.mxu0 0
    %258 = vmatpush1.bf16.msra.mxu0 0
    %259 = vmatprep.subr.bf16.mxu0 0
    %260 = vmatpush1.bf16.msra.mxu0 0
    %261 = vmatprep.subr.bf16.mxu0 0
    %262 = vmatpush1.bf16.msra.mxu0 0
    %263 = vmatprep.subr.bf16.mxu0 0
    %264 = vmatpush1.bf16.msra.mxu0 0
    %265 = vmatprep.subr.bf16.mxu0 0
    %266 = vmatpush1.bf16.msra.mxu0 0
    %267 = vmatprep.subr.bf16.mxu0 0
    %268 = vmatpush1.bf16.msra.mxu0 0
    %269 = vmatprep.subr.bf16.mxu0 0
    %270 = vmatpush1.bf16.msra.mxu0 0
    %271 = vmatprep.mubr.bf16.mxu0 0
    %272 = vmatmul.mubr.bf16.gmra.mrb[0].mxu0 %v167
    %v273 = vpop.f32.mrb[0].mxu0
    %v274 = vadd.f32 %v189, %v273
    %v275 = vpop.f32.mrb[0].mxu0
    %v276 = vpop.f32.mrb[0].mxu0
    %v277 = vpop.f32.mrb[0].mxu0
    %278 = vdwg.mxu0
    %279 = vst [vmem:[#allocation7] sm:$0xff] %v274
    // Predicated region
    $region30: #{embed_fc_forward.1} parent=1 // pred_check
      _
    $region31: #{embed_fc_forward.1} parent=1 // pred_check_branch
      %281 = sbr.rel (0) target = $region33
    $region32: #{embed_fc_forward.1} parent=1 // pred_region
      %s283 = ssub.s32 128, 128
      %284 = vsyncadd [#allocation4], %s283
      %s286 = sshll.u32 [#allocation7], 4
      %s287 = int_to_ptr.vmem [resolvable:$true] %s286
      %289 = dma.vmem_to_hbm [thread:$0]  %s287, 128, %s5, [#allocation4]
    $region33: #{embed_fc_forward.1} parent=1 // pred_fallthru
      _
    // Predicated region
    $region34: #{embed_fc_forward.1} parent=1 // pred_check
      _
    $region35: #{embed_fc_forward.1} parent=1 // pred_check_branch
      %291 = sbr.rel (0) target = $region37
    $region36: #{embed_fc_forward.1} parent=1 // pred_region
      %292 = dma.done [#allocation4], 128
    $region37: #{embed_fc_forward.1} parent=1 // pred_fallthru
      _
    %293 = vsyncpa [#allocation3], 1
    %294 = vsyncpa [#allocation6], 1
    %295 = vsyncpa [#allocation4], 1

</llo_original>
